<compile_context>
chip_gen: v6e
topology: v6e:2x2x1
jax: 0.10.0
libtpu: 0.0.40
codegen_flags: <defaults>
</compile_context>

<pallas_src>
import functools

import jax
import jax.numpy as jnp
from jax.experimental import pallas as pl
from jax.experimental.pallas import tpu as pltpu

MATMUL_DTYPE = jnp.bfloat16           # MXU operand dtype; f32 accumulation everywhere.
VMEM_LIMIT_BYTES = 32 * 1024 * 1024   # explicit scoped-VMEM limit (safe on v5e/v6e/v7x)
HEAD_BN_CAP = 4096                    # max batch-block rows on the head path
FULL_BN_CAP = 64                      # max batch-block rows on the encoder path
FULL_CHUNK_ROWS = 4096                # max bn*Pc im2col rows per grid step


# --------------------------------------------------------------------------- #
# In-kernel math
# --------------------------------------------------------------------------- #
def _softplus(x):
    # torch.nn.Softplus(beta=1, threshold=20), computed in f32 (VPU + EUP).
    return jnp.where(x > 20.0, x, jnp.log1p(jnp.exp(jnp.minimum(x, 20.0))))


def _cond_linear_chain(eps, w1, w2, w3, hvecs):
    """ConditionalGuidedLinearModel: (CondLinear -> Softplus) x2 -> Linear.

    Per-step gammas are pre-folded into w1/w2 and the bias slab rows
    (hvecs: 0 = gamma1*b1, 1 = gamma2*b2, 2 = b3), all zero-padded to `slab`
    lanes, so every stage is just matmul + bias (+ softplus)."""
    mm = w1.dtype
    h = _softplus(jnp.dot(eps, w1, preferred_element_type=jnp.float32)
                  + hvecs[0:1, :])
    h = _softplus(jnp.dot(h.astype(mm), w2, preferred_element_type=jnp.float32)
                  + hvecs[1:2, :])
    return jnp.dot(h.astype(mm), w3, preferred_element_type=jnp.float32) + hvecs[2:3, :]


# --------------------------------------------------------------------------- #
# Pallas kernels
# --------------------------------------------------------------------------- #
def _head_kernel(eps_ref, w1_ref, w2_ref, w3_ref, hvecs_ref, out_ref):
    """Fast path: cond_guide_model head only (the value PyTorch returns)."""
    out_ref[...] = _cond_linear_chain(eps_ref[...], w1_ref[...], w2_ref[...],
                                      w3_ref[...], hvecs_ref[...])


def _fused_kernel(patches_ref, pool_ref, cw_ref, fcw_ref, wc_ref, evecs_ref,
                  eps_ref, w1_ref, w2_ref, w3_ref, hvecs_ref,
                  out_ref, connect_ref, acc_ref):
    """Faithful path: encoder + norm + connect_module + head in one kernel.

    Grid = (batch blocks ["parallel"], spatial chunks ["arbitrary"]).  The conv
    + pooling stage runs per spatial chunk into a per-sample sum accumulator
    (acc_ref); the encoder tail, connect_module and head run once at the last
    chunk."""
    s = pl.program_id(1)

    @pl.when(s == 0)
    def _():
        acc_ref[...] = jnp.zeros_like(acc_ref)

    # Conv2d(3x3, pad=1) as one flat im2col matmul (bias folded via ones col) -> ReLU.
    cw = cw_ref[...]
    p3 = patches_ref[...]
    bn, pc, k = p3.shape
    act = jnp.maximum(
        jnp.dot(p3.reshape(bn * pc, k), cw, preferred_element_type=jnp.float32),
        0.0)                                                           # [bn*pc, Cc]
    # Partial global-average pool (sum; the 1/P scale is folded into fcw) as an
    # MXU matmul against the resident block-diagonal ones matrix.
    acc_ref[...] += jnp.dot(pool_ref[...], act.astype(cw.dtype),
                            preferred_element_type=jnp.float32)        # [bn, Cc]

    @pl.when(s == pl.num_programs(1) - 1)
    def _():
        mm = cw.dtype
        evecs = evecs_ref[...]
        # encoder's final Linear (1/P folded into fcw; bias = evecs row 0)
        feat = jnp.dot(acc_ref[...].astype(mm), fcw_ref[...],
                       preferred_element_type=jnp.float32) + evecs[0:1, :]
        # self.norm (BatchNorm1d, eval mode)
        xn = feat * evecs[1:2, :] + evecs[2:3, :]
        # connect_module: CondLinear (gamma folded) -> BatchNorm1d -> Softplus
        z = jnp.dot(xn.astype(mm), wc_ref[...],
                    preferred_element_type=jnp.float32) + evecs[3:4, :]
        connect_ref[...] = _softplus(z * evecs[4:5, :] + evecs[5:6, :])
        # cond_guide_model head — the PyTorch forward's return value.
        out_ref[...] = _cond_linear_chain(eps_ref[...], w1_ref[...], w2_ref[...],
                                          w3_ref[...], hvecs_ref[...])


# --------------------------------------------------------------------------- #
# Spec / packing / tiling helpers
# --------------------------------------------------------------------------- #
def _repl_spec(shape):
    nd = len(shape)
    return pl.BlockSpec(tuple(shape), lambda *_: (0,) * nd)


def _batch_spec(shape, bn):
    nd = len(shape)
    return pl.BlockSpec((bn,) + tuple(shape[1:]),
                        lambda i, *_: (i,) + (0,) * (nd - 1))


def _pad2(m, rows, cols):
    return jnp.pad(m, ((0, rows - m.shape[0]), (0, cols - m.shape[1])))


def _choose_head_bn(n, cap=HEAD_BN_CAP):
    """Head-path batch-block rows.  Small/awkward batches -> one block
    (grid=(1,), best on single-TC v5e/v6e).  Large, cleanly-splitting batches
    -> two big "parallel" blocks (v7x megacore), halving only while a block
    exceeds `cap` rows (~1.5 KiB/row working set)."""
    if n < 32 or n % 16 != 0:
        return n
    bn = n // 2
    while bn > cap and bn % 2 == 0 and (bn // 2) % 8 == 0 and n % (bn // 2) == 0:
        bn //= 2
    return bn


def _choose_full_bn(n, cap=FULL_BN_CAP):
    """Encoder-path batch-block rows: kept <= cap so the block-diag pooling
    matrix and per-chunk activations stay small; must divide N and be
    8-aligned whenever the batch is actually split."""
    if n <= cap:
        return n
    for bn in range(cap, 7, -1):
        if n % bn == 0 and bn % 8 == 0:
            return bn
    return n


def _choose_chunk(p, bn, max_rows=FULL_CHUNK_ROWS):
    """Spatial rows (of P=H*W) per grid step on the encoder path so the im2col
    patch block (bn*pc rows, lane-padded) stays bounded on every TPU gen."""
    if bn * p <= max_rows:
        return p
    for c in range(max(max_rows // bn, 8), 7, -1):
        if p % c == 0 and c % 8 == 0:
            return c
    return p  # no clean 8-aligned divisor: fall back to a single chunk


# --------------------------------------------------------------------------- #
# Parameters (deterministic, synthetic)
# --------------------------------------------------------------------------- #
def init_params(key, *, cin, cconv, x_dim, y_dim, n_hidden, n_steps):
    ks = iter(jax.random.split(key, 32))

    def linear(fan_in, fan_out):
        bound = 1.0 / float(fan_in) ** 0.5
        w = jax.random.uniform(next(ks), (fan_in, fan_out), jnp.float32, -bound, bound)
        b = jax.random.uniform(next(ks), (1, fan_out), jnp.float32, -bound, bound)
        return w, b

    p = {}
    # encoder: Conv2d(cin, cconv, 3, padding=1) -> ReLU -> GAP -> Linear(cconv, x_dim)
    cbound = 1.0 / float(cin * 9) ** 0.5
    p["conv_w"] = jax.random.uniform(next(ks), (3, 3, cin, cconv), jnp.float32, -cbound, cbound)
    p["conv_b"] = jax.random.uniform(next(ks), (1, cconv), jnp.float32, -cbound, cbound)
    p["fc_w"], p["fc_b"] = linear(cconv, x_dim)

    # self.norm = BatchNorm1d(x_dim)  (eval mode, default stats/affine)
    p["bn1_scale"] = jnp.full((1, x_dim), 1.0 / (1.0 + 1e-5) ** 0.5, jnp.float32)
    p["bn1_shift"] = jnp.zeros((1, x_dim), jnp.float32)

    # connect_module: ConditionalLinear(x_dim, x_dim, n_steps),
    #                 BatchNorm1d(x_dim, eps=x_dim), Softplus
    p["wc"], p["bc"] = linear(x_dim, x_dim)
    p["embed_c"] = jax.random.uniform(next(ks), (n_steps, x_dim), jnp.float32, 0.0, 1.0)
    p["bn2_scale"] = jnp.full((1, x_dim), 1.0 / (1.0 + float(x_dim)) ** 0.5, jnp.float32)
    p["bn2_shift"] = jnp.zeros((1, x_dim), jnp.float32)

    # cond_guide_model: cat_x=False, cat_y_pred=True -> data_dim = 2*y_dim
    data_dim = 2 * y_dim
    h1, h2 = n_hidden
    p["w1"], p["b1"] = linear(data_dim, h1)
    p["embed_1"] = jax.random.uniform(next(ks), (n_steps, h1), jnp.float32, 0.0, 1.0)
    p["w2"], p["b2"] = linear(h1, h2)
    p["embed_2"] = jax.random.uniform(next(ks), (n_steps, h2), jnp.float32, 0.0, 1.0)
    p["w3"], p["b3"] = linear(h2, y_dim)
    return p


# --------------------------------------------------------------------------- #
# Forward wrapper
# --------------------------------------------------------------------------- #
@functools.partial(jax.jit, static_argnames=("compute_connect",))
def conditional_guided_conv_model(params, x_nchw, y_t, y_0_hat, t,
                                  compute_connect=False):
    N = y_t.shape[0]
    x_dim = params["fc_w"].shape[1]
    y_dim = params["w3"].shape[1]
    h1 = params["w1"].shape[1]
    h2 = params["w2"].shape[1]
    data_dim = params["w1"].shape[0]
    slab = 128 * pl.cdiv(max(h1, h2, y_dim), 128)       # lane-dense hidden/output width

    # ---- per-step gamma lookups folded into weights/biases (f32, done by XLA);
    #      weights lane-padded and cast to the MXU dtype once.
    g1 = params["embed_1"][t]                            # [1, h1]
    g2 = params["embed_2"][t]                            # [1, h2]
    w1p = _pad2(params["w1"] * g1, data_dim, slab).astype(MATMUL_DTYPE)
    w2p = _pad2(params["w2"] * g2, slab, slab).astype(MATMUL_DTYPE)
    w3p = _pad2(params["w3"], slab, slab).astype(MATMUL_DTYPE)
    hvecs = jnp.concatenate([_pad2(params["b1"] * g1, 1, slab),
                             _pad2(params["b2"] * g2, 1, slab),
                             _pad2(params["b3"], 1, slab)], axis=0)       # [3, slab] f32
    eps = jnp.concatenate([y_t, y_0_hat], axis=1).astype(MATMUL_DTYPE)    # [N, 2*y_dim]

    out_shape = jax.ShapeDtypeStruct((N, slab), jnp.float32)
    head_args = (eps, w1p, w2p, w3p, hvecs)

    def head_specs(bn):
        return [_batch_spec(eps.shape, bn), _repl_spec(w1p.shape),
                _repl_spec(w2p.shape), _repl_spec(w3p.shape),
                _repl_spec(hvecs.shape)]

    if not compute_connect:
        # Fast path: the PyTorch forward's return value never depends on the
        # encoder/norm/connect_module branch (cat_x=False discards it).
        bn = _choose_head_bn(N)
        out_pad = pl.pallas_call(
            _head_kernel, grid=(N // bn,),
            in_specs=head_specs(bn),
            out_specs=_batch_spec((N, slab), bn),
            out_shape=out_shape,
            compiler_params=pltpu.CompilerParams(
                dimension_semantics=("parallel",),
                vmem_limit_bytes=VMEM_LIMIT_BYTES),
        )(*head_args)
        return out_pad[:, :y_dim]

    # ---- Full faithful path: encoder -> norm -> connect_module also executed
    #      (and, exactly as in PyTorch, its result is discarded).
    _, Cin, H, W = x_nchw.shape
    P = H * W
    cconv = params["conv_w"].shape[-1]
    K = 9 * Cin + 1
    xpad = 128 * pl.cdiv(x_dim, 128)

    bn_f = _choose_full_bn(N)
    pc = _choose_chunk(P, bn_f)
    grid = (N // bn_f, P // pc)

    # glue: NCHW -> NHWC, pad, im2col (kept 3D so spatial chunks tile cleanly);
    # conv bias folded in via a trailing ones column.
    xi = jnp.transpose(x_nchw, (0, 2, 3, 1)).astype(jnp.float32)
    xpd = jnp.pad(xi, ((0, 0), (1, 1), (1, 1), (0, 0)))
    cols = [xpd[:, kh:kh + H, kw:kw + W, :] for kh in range(3) for kw in range(3)]
    patches = jnp.concatenate(cols, axis=-1).reshape(N, P, 9 * Cin)
    patches = jnp.concatenate(
        [patches, jnp.ones((N, P, 1), jnp.float32)], axis=-1).astype(MATMUL_DTYPE)

    cw = jnp.concatenate([params["conv_w"].reshape(9 * Cin, cconv),
                          params["conv_b"]], axis=0).astype(MATMUL_DTYPE)   # [K, Cc]
    # Block-diagonal ONES pooling matrix for one (bn_f, pc) chunk (constant
    # index_map -> stays resident in VMEM); 1/P folded into fc_w in f32.
    pool = (jnp.arange(bn_f)[:, None] ==
            (jnp.arange(bn_f * pc) // pc)[None, :]).astype(MATMUL_DTYPE)    # [bn_f, bn_f*pc]
    fcw = _pad2(params["fc_w"] * (1.0 / P), cconv, xpad).astype(MATMUL_DTYPE)
    gc = params["embed_c"][t]                                               # [1, x_dim]
    wcp = _pad2(params["wc"] * gc, xpad, xpad).astype(MATMUL_DTYPE)
    evecs = jnp.concatenate(
        [_pad2(params["fc_b"], 1, xpad),
         _pad2(params["bn1_scale"], 1, xpad), _pad2(params["bn1_shift"], 1, xpad),
         _pad2(params["bc"] * gc, 1, xpad),
         _pad2(params["bn2_scale"], 1, xpad), _pad2(params["bn2_shift"], 1, xpad)],
        axis=0)                                                             # [6, xpad] f32

    enc_specs = [pl.BlockSpec((bn_f, pc, K), lambda i, s: (i, s, 0)),       # patches
                 _repl_spec(pool.shape), _repl_spec(cw.shape),
                 _repl_spec(fcw.shape), _repl_spec(wcp.shape),
                 _repl_spec(evecs.shape)]

    out_pad, _connect = pl.pallas_call(
        _fused_kernel, grid=grid,
        in_specs=enc_specs + head_specs(bn_f),
        out_specs=(_batch_spec((N, slab), bn_f), _batch_spec((N, xpad), bn_f)),
        out_shape=(out_shape, jax.ShapeDtypeStruct((N, xpad), jnp.float32)),
        scratch_shapes=[pltpu.VMEM((bn_f, cconv), jnp.float32)],
        compiler_params=pltpu.CompilerParams(
            dimension_semantics=("parallel", "arbitrary"),
            vmem_limit_bytes=VMEM_LIMIT_BYTES),
    )(patches, pool, cw, fcw, wcp, evecs, *head_args)
    # _connect (lane-padded connect_module output) is discarded, as in PyTorch.
    return out_pad[:, :y_dim]


# --------------------------------------------------------------------------- #
if __name__ == "__main__":
    key = jax.random.PRNGKey(0)
    kp, kx, kyt, ky0 = jax.random.split(key, 4)

    N, Cin, H, W = 2, 4, 16, 16
    x_dim, y_dim, n_steps = 16, 2, 10
    n_hidden = (64, 64)

    params = init_params(kp, cin=Cin, cconv=8, x_dim=x_dim, y_dim=y_dim,
                         n_hidden=n_hidden, n_steps=n_steps)

    x = jax.random.normal(kx, (N, Cin, H, W), jnp.float32)
    y_t = jax.random.normal(kyt, (N, y_dim), jnp.float32)
    y_0_hat = jax.random.normal(ky0, (N, y_dim), jnp.float32)
    t = jnp.array([3], dtype=jnp.int32)

    # Fast path (default): head only — the value the PyTorch forward returns.
    out = conditional_guided_conv_model(params, x, y_t, y_0_hat, t)
    # Fully faithful fused path (encoder + norm + connect_module also executed).
    out_full = conditional_guided_conv_model(params, x, y_t, y_0_hat, t,
                                             compute_connect=True)
    jax.block_until_ready((out, out_full))

    assert out.shape == (N, y_dim) and out.dtype == jnp.float32
    assert out_full.shape == (N, y_dim)
    assert bool(jnp.allclose(out, out_full, atol=1e-2, rtol=1e-2))
    print("KERNEL_OK")
</pallas_src>

<mosaic_0001>
module attributes {stable_mosaic.version = 11 : i64} {
  func.func @_head_kernel(%arg0: i32, %arg1: memref<2x4xbf16, #tpu.memory_space<vmem>>, %arg2: memref<4x128xbf16, #tpu.memory_space<vmem>>, %arg3: memref<128x128xbf16, #tpu.memory_space<vmem>>, %arg4: memref<128x128xbf16, #tpu.memory_space<vmem>>, %arg5: memref<3x128xf32, #tpu.memory_space<vmem>>, %arg6: memref<2x128xf32, #tpu.memory_space<vmem>>) attributes {dimension_semantics = [#tpu.dimension_semantics<parallel>], iteration_bounds = array<i64: 1>, scalar_prefetch = 0 : i64, scratch_operands = 0 : i64, tpu.core_type = #tpu.core_type<tc>, window_params = [{transform_indices = @transform_0, window_bounds = array<i64: 2, 4>}, {pipeline_mode = #tpu.pipeline_mode<synchronous>, transform_indices = @transform_1, window_bounds = array<i64: 4, 128>}, {pipeline_mode = #tpu.pipeline_mode<synchronous>, transform_indices = @transform_2, window_bounds = array<i64: 128, 128>}, {pipeline_mode = #tpu.pipeline_mode<synchronous>, transform_indices = @transform_3, window_bounds = array<i64: 128, 128>}, {pipeline_mode = #tpu.pipeline_mode<synchronous>, transform_indices = @transform_4, window_bounds = array<i64: 3, 128>}, {transform_indices = @transform_5, window_bounds = array<i64: 2, 128>}]} {
    %c0 = arith.constant 0 : index
    %c0_0 = arith.constant 0 : index
    %0 = vector.load %arg1[%c0, %c0_0] : memref<2x4xbf16, #tpu.memory_space<vmem>>, vector<2x4xbf16>
    %c0_1 = arith.constant 0 : index
    %c0_2 = arith.constant 0 : index
    %1 = vector.load %arg2[%c0_1, %c0_2] : memref<4x128xbf16, #tpu.memory_space<vmem>>, vector<4x128xbf16>
    %c0_3 = arith.constant 0 : index
    %c0_4 = arith.constant 0 : index
    %2 = vector.load %arg3[%c0_3, %c0_4] : memref<128x128xbf16, #tpu.memory_space<vmem>>, vector<128x128xbf16>
    %c0_5 = arith.constant 0 : index
    %c0_6 = arith.constant 0 : index
    %3 = vector.load %arg4[%c0_5, %c0_6] : memref<128x128xbf16, #tpu.memory_space<vmem>>, vector<128x128xbf16>
    %c0_7 = arith.constant 0 : index
    %c0_8 = arith.constant 0 : index
    %4 = vector.load %arg5[%c0_7, %c0_8] : memref<3x128xf32, #tpu.memory_space<vmem>>, vector<3x128xf32>
    %cst = arith.constant dense<0.000000e+00> : vector<2x128xf32>
    %5 = tpu.matmul %0, %1, %cst {dimension_numbers = #tpu.dot_dimension_numbers<[1], [0], [0], [1], [0, 0, 1, 1], [], []>} : vector<2x4xbf16>, vector<4x128xbf16>, vector<2x128xf32> -> vector<2x128xf32>
    %6 = vector.extract_strided_slice %4 {offsets = [0, 0], sizes = [1, 128], strides = [1, 1]} : vector<3x128xf32> to vector<1x128xf32>
    %7 = vector.broadcast %6 : vector<1x128xf32> to vector<2x128xf32>
    %8 = arith.addf %5, %7 : vector<2x128xf32>
    %cst_9 = arith.constant 2.000000e+01 : f32
    %9 = vector.broadcast %cst_9 : f32 to vector<2x128xf32>
    %10 = arith.cmpf ogt, %8, %9 : vector<2x128xf32>
    %cst_10 = arith.constant 2.000000e+01 : f32
    %11 = vector.broadcast %cst_10 : f32 to vector<2x128xf32>
    %12 = arith.minimumf %8, %11 : vector<2x128xf32>
    %13 = math.exp %12 : vector<2x128xf32>
    %14 = math.log1p %13 : vector<2x128xf32>
    %15 = arith.select %10, %8, %14 : vector<2x128xi1>, vector<2x128xf32>
    %16 = arith.truncf %15 : vector<2x128xf32> to vector<2x128xbf16>
    %cst_11 = arith.constant dense<0.000000e+00> : vector<2x128xf32>
    %17 = tpu.matmul %16, %2, %cst_11 {dimension_numbers = #tpu.dot_dimension_numbers<[1], [0], [0], [1], [0, 0, 1, 1], [], []>} : vector<2x128xbf16>, vector<128x128xbf16>, vector<2x128xf32> -> vector<2x128xf32>
    %18 = vector.extract_strided_slice %4 {offsets = [1, 0], sizes = [1, 128], strides = [1, 1]} : vector<3x128xf32> to vector<1x128xf32>
    %19 = vector.broadcast %18 : vector<1x128xf32> to vector<2x128xf32>
    %20 = arith.addf %17, %19 : vector<2x128xf32>
    %cst_12 = arith.constant 2.000000e+01 : f32
    %21 = vector.broadcast %cst_12 : f32 to vector<2x128xf32>
    %22 = arith.cmpf ogt, %20, %21 : vector<2x128xf32>
    %cst_13 = arith.constant 2.000000e+01 : f32
    %23 = vector.broadcast %cst_13 : f32 to vector<2x128xf32>
    %24 = arith.minimumf %20, %23 : vector<2x128xf32>
    %25 = math.exp %24 : vector<2x128xf32>
    %26 = math.log1p %25 : vector<2x128xf32>
    %27 = arith.select %22, %20, %26 : vector<2x128xi1>, vector<2x128xf32>
    %28 = arith.truncf %27 : vector<2x128xf32> to vector<2x128xbf16>
    %cst_14 = arith.constant dense<0.000000e+00> : vector<2x128xf32>
    %29 = tpu.matmul %28, %3, %cst_14 {dimension_numbers = #tpu.dot_dimension_numbers<[1], [0], [0], [1], [0, 0, 1, 1], [], []>} : vector<2x128xbf16>, vector<128x128xbf16>, vector<2x128xf32> -> vector<2x128xf32>
    %30 = vector.extract_strided_slice %4 {offsets = [2, 0], sizes = [1, 128], strides = [1, 1]} : vector<3x128xf32> to vector<1x128xf32>
    %31 = vector.broadcast %30 : vector<1x128xf32> to vector<2x128xf32>
    %32 = arith.addf %29, %31 : vector<2x128xf32>
    %c0_15 = arith.constant 0 : index
    %c0_16 = arith.constant 0 : index
    %33 = vector.load %arg6[%c0_15, %c0_16] : memref<2x128xf32, #tpu.memory_space<vmem>>, vector<2x128xf32>
    tpu.vector_store %arg6[%c0_15, %c0_16], %32 {strides = array<i32>} : memref<2x128xf32, #tpu.memory_space<vmem>>, vector<2x128xf32>,
    return
  }
  func.func @transform_0(%arg0: i32) -> (i32, i32) {
    %c0_i32 = arith.constant 0 : i32
    %c0_i32_0 = arith.constant 0 : i32
    return %arg0, %c0_i32 : i32, i32
  }
  func.func @transform_1(%arg0: i32) -> (i32, i32) {
    %c0_i32 = arith.constant 0 : i32
    %c0_i32_0 = arith.constant 0 : i32
    %c0_i32_1 = arith.constant 0 : i32
    return %c0_i32, %c0_i32_0 : i32, i32
  }
  func.func @transform_2(%arg0: i32) -> (i32, i32) {
    %c0_i32 = arith.constant 0 : i32
    %c0_i32_0 = arith.constant 0 : i32
    %c0_i32_1 = arith.constant 0 : i32
    return %c0_i32, %c0_i32_0 : i32, i32
  }
  func.func @transform_3(%arg0: i32) -> (i32, i32) {
    %c0_i32 = arith.constant 0 : i32
    %c0_i32_0 = arith.constant 0 : i32
    %c0_i32_1 = arith.constant 0 : i32
    return %c0_i32, %c0_i32_0 : i32, i32
  }
  func.func @transform_4(%arg0: i32) -> (i32, i32) {
    %c0_i32 = arith.constant 0 : i32
    %c0_i32_0 = arith.constant 0 : i32
    %c0_i32_1 = arith.constant 0 : i32
    return %c0_i32, %c0_i32_0 : i32, i32
  }
  func.func @transform_5(%arg0: i32) -> (i32, i32) {
    %c0_i32 = arith.constant 0 : i32
    %c0_i32_0 = arith.constant 0 : i32
    return %arg0, %c0_i32 : i32, i32
  }
}

</mosaic_0001>

<llo_original>
// kernel: conditional_guided_conv_model.1
$region0: #{conditional_guided_conv_model.1}
  #allocation0 [shape = 'u32[]', space=smem, size = 0x4, offset = 0x4, fixed_abs, tag = 'smem constant byte address 0x4 - core index']
  #allocation1 [shape = 'u32[144,128]{1,0:T(1,128)}', space=vmem, size = 0x12000, scoped, tag = 'internal scratch']
  %s0 = inlined_call_operand.vmem [shape: bf16[2,4], index: 0, kind: input, shape index: {}]
  %s1 = inlined_call_operand.vmem [shape: bf16[4,128], index: 1, kind: input, shape index: {}]
  %s2 = inlined_call_operand.vmem [shape: bf16[128,128], index: 2, kind: input, shape index: {}]
  %s3 = inlined_call_operand.vmem [shape: bf16[128,128], index: 3, kind: input, shape index: {}]
  %s4 = inlined_call_operand.vmem [shape: f32[3,128], index: 4, kind: input, shape index: {}]
  %s5 = inlined_call_operand.hbm [shape: f32[2,128], index: 5, kind: output, shape index: {}]
  %s6 = sld [smem:[#allocation0]]
  $region30: #{conditional_guided_conv_model.1} parent=0
    _
  %s8 = ssub.s32 1, %s6
  %s9 = scalar_select 0, %s8, %s6
  $region1: #{conditional_guided_conv_model.1} parent=0
    #allocation2 [shape = 'u8[1024]{0}', space=vmem, size = 0x400, scoped, tag = 'output window, operand 0, single buffered']
    #allocation3 [shape = 's32[1]{0}', space=sflag, size = 0x4, scoped, tag = 'scoped memory for conditional_guided_conv_model.1']
    %10 = vsyncpa [#allocation3], 0
    // Predicated region
    $region2: #{conditional_guided_conv_model.1} parent=1 // pred_check
      _
    $region3: #{conditional_guided_conv_model.1} parent=1 // pred_check_branch
      %12 = sbr.rel (0) target = $region5
    $region4: #{conditional_guided_conv_model.1} parent=1 // pred_region
      _
    $region5: #{conditional_guided_conv_model.1} parent=1 // pred_fallthru
      _
    // Predicated region
    $region6: #{conditional_guided_conv_model.1} parent=1 // pred_check
      _
    $region7: #{conditional_guided_conv_model.1} parent=1 // pred_check_branch
      %14 = sbr.rel (0) target = $region9
    $region8: #{conditional_guided_conv_model.1} parent=1 // pred_region
      _
    $region9: #{conditional_guided_conv_model.1} parent=1 // pred_fallthru
      _
    // Predicated region
    $region10: #{conditional_guided_conv_model.1} parent=1 // pred_check
      _
    $region11: #{conditional_guided_conv_model.1} parent=1 // pred_check_branch
      %16 = sbr.rel (0) target = $region13
    $region12: #{conditional_guided_conv_model.1} parent=1 // pred_region
      _
    $region13: #{conditional_guided_conv_model.1} parent=1 // pred_fallthru
      _
    // Predicated region
    $region14: #{conditional_guided_conv_model.1} parent=1 // pred_check
      _
    $region15: #{conditional_guided_conv_model.1} parent=1 // pred_check_branch
      %18 = sbr.rel (0) target = $region17
    $region16: #{conditional_guided_conv_model.1} parent=1 // pred_region
      _
    $region17: #{conditional_guided_conv_model.1} parent=1 // pred_fallthru
      _
    // Predicated region
    $region18: #{conditional_guided_conv_model.1} parent=1 // pred_check
      _
    $region19: #{conditional_guided_conv_model.1} parent=1 // pred_check_branch
      %20 = sbr.rel (0) target = $region21
    $region20: #{conditional_guided_conv_model.1} parent=1 // pred_region
      _
    $region21: #{conditional_guided_conv_model.1} parent=1 // pred_fallthru
      _
    %v22 = vld [vmem:[%s0] sm:$0x1]
    %v23 = vld [vmem:[%s1] sm:$0x3]
    %v24 = vld [vmem:[%s2] sm:$0xf]
    %v25 = vld [vmem:[%s2 + $0x4] sm:$0xf]
    %v26 = vld [vmem:[%s2 + $0x8] sm:$0xf]
    %v27 = vld [vmem:[%s2 + $0xc] sm:$0xf]
    %v28 = vld [vmem:[%s2 + $0x10] sm:$0xf]
    %v29 = vld [vmem:[%s2 + $0x14] sm:$0xf]
    %v30 = vld [vmem:[%s2 + $0x18] sm:$0xf]
    %v31 = vld [vmem:[%s2 + $0x1c] sm:$0xf]
    %v32 = vld [vmem:[%s2 + $0x20] sm:$0xf]
    %v33 = vld [vmem:[%s2 + $0x24] sm:$0xf]
    %v34 = vld [vmem:[%s2 + $0x28] sm:$0xf]
    %v35 = vld [vmem:[%s2 + $0x2c] sm:$0xf]
    %v36 = vld [vmem:[%s2 + $0x30] sm:$0xf]
    %v37 = vld [vmem:[%s2 + $0x34] sm:$0xf]
    %v38 = vld [vmem:[%s2 + $0x38] sm:$0xf]
    %v39 = vld [vmem:[%s2 + $0x3c] sm:$0xf]
    %v40 = vld [vmem:[%s3] sm:$0xf]
    %v41 = vld [vmem:[%s3 + $0x4] sm:$0xf]
    %v42 = vld [vmem:[%s3 + $0x8] sm:$0xf]
    %v43 = vld [vmem:[%s3 + $0xc] sm:$0xf]
    %v44 = vld [vmem:[%s3 + $0x10] sm:$0xf]
    %v45 = vld [vmem:[%s3 + $0x14] sm:$0xf]
    %v46 = vld [vmem:[%s3 + $0x18] sm:$0xf]
    %v47 = vld [vmem:[%s3 + $0x1c] sm:$0xf]
    %v48 = vld [vmem:[%s3 + $0x20] sm:$0xf]
    %v49 = vld [vmem:[%s3 + $0x24] sm:$0xf]
    %v50 = vld [vmem:[%s3 + $0x28] sm:$0xf]
    %v51 = vld [vmem:[%s3 + $0x2c] sm:$0xf]
    %v52 = vld [vmem:[%s3 + $0x30] sm:$0xf]
    %v53 = vld [vmem:[%s3 + $0x34] sm:$0xf]
    %v54 = vld [vmem:[%s3 + $0x38] sm:$0xf]
    %v55 = vld [vmem:[%s3 + $0x3c] sm:$0xf]
    %v56 = vld [vmem:[%s4] sm:$0x7]
    %v57 = vlaneseq
    %v58 = vshrl.u32 %v57, 7
    %v59 = vsub.s32 0, %v58
    %v60 = vrot.slane %v56, %v59
    %vm61 = vcmask 31744
    %v63 = vsel %vm61, %v22, 0
    %vm65 = vcmask 1041408
    %v67 = vsel %vm65, %v23, 0
    %69 = vmatprep.subr.bf16.mxu0 0
    %70 = vmatpush1.bf16.msra.mxu0 0
    %71 = vmatprep.subr.bf16.mxu0 0
    %72 = vmatpush1.bf16.msra.mxu0 0
    %73 = vmatprep.subr.bf16.mxu0 0
    %74 = vmatpush1.bf16.msra.mxu0 0
    %75 = vmatprep.subr.bf16.mxu0 0
    %76 = vmatpush1.bf16.msra.mxu0 0
    %77 = vmatprep.subr.bf16.mxu0 0
    %78 = vmatpush1.bf16.msra.mxu0 0
    %79 = vmatprep.subr.bf16.mxu0 0
    %80 = vmatpush1.bf16.msra.mxu0 0
    %81 = vmatprep.subr.bf16.mxu0 0
    %82 = vmatpush1.bf16.msra.mxu0 0
    %83 = vmatprep.subr.bf16.mxu0 0
    %84 = vmatpush1.bf16.msra.mxu0 %v67
    %85 = vmatprep.subr.bf16.mxu0 0
    %86 = vmatpush2.bf16.msra.mxu0 0
    %87 = vmatprep.subr.bf16.mxu0 0
    %88 = vmatpush2.bf16.msra.mxu0 0
    %89 = vmatprep.subr.bf16.mxu0 0
    %90 = vmatpush2.bf16.msra.mxu0 0
    %91 = vmatprep.subr.bf16.mxu0 0
    %92 = vmatpush2.bf16.msra.mxu0 0
    %93 = vmatprep.subr.bf16.mxu0 0
    %94 = vmatpush2.bf16.msra.mxu0 0
    %95 = vmatprep.subr.bf16.mxu0 0
    %96 = vmatpush2.bf16.msra.mxu0 0
    %97 = vmatprep.subr.bf16.mxu0 0
    %98 = vmatpush2.bf16.msra.mxu0 0
    %99 = vmatprep.subr.bf16.mxu0 0
    %100 = vmatpush2.bf16.msra.mxu0 0
    %101 = vmatprep.mubr.bf16.mxu0 0
    %102 = vmatmul.mubr.bf16.gmra.mxu0 %v63
    %v103 = vpop.f32.mrf.mxu0
    %v104 = vadd.f32 %v60, %v103
    %v105 = vpop.f32.mrf.mxu0
    %v106 = vpop.f32.mrf.mxu0
    %v107 = vpop.f32.mrf.mxu0
    %108 = vdwg.mxu0
    %vm109 = vcmp.gt.f32.partialorder %v104, 20.0
    %v110 = vmin.f32 %v104, 20.0
    %v111 = vmul.f32 %v110, 1.442695
    %v112 = vpow.pop %v111
    %v113 = vadd.f32 %v112, 1.0
    %v114 = vlog2.pop %v113
    %v115 = vmul.f32 %v114, 0.6931472
    %v116 = vmul.f32 -0.5, %v112
    %v117 = vadd.f32 %v116, 1.0
    %v118 = vmul.f32 %v117, %v112
    %v119 = vand.u32 2147483647, %v112
    %vm120 = vcmp.lt.f32.partialorder %v119, 0.0004427343
    %v121 = vsel %vm120, %v118, %v115
    %v122 = vsel %vm109, %v104, %v121
    %v123 = vpack.c.bf16 %v122, %v122
    %v124 = vlaneseq
    %v125 = vshrl.u32 %v124, 7
    %v126 = vsub.s32 1, %v125
    %v127 = vrot.slane %v56, %v126
    %v144 = vunpack.c.l.b16 %v24
    %v145 = vunpack.c.l.b16 %v25
    %v146 = vunpack.c.l.b16 %v26
    %v147 = vunpack.c.l.b16 %v27
    %v148 = vunpack.c.l.b16 %v28
    %v149 = vunpack.c.l.b16 %v29
    %v150 = vunpack.c.l.b16 %v30
    %v151 = vunpack.c.l.b16 %v31
    %v152 = vunpack.c.l.b16 %v32
    %v153 = vunpack.c.l.b16 %v33
    %v154 = vunpack.c.l.b16 %v34
    %v155 = vunpack.c.l.b16 %v35
    %v156 = vunpack.c.l.b16 %v36
    %v157 = vunpack.c.l.b16 %v37
    %v158 = vunpack.c.l.b16 %v38
    %v159 = vunpack.c.l.b16 %v39
    %v160 = vpack.c.b16 %v145, %v144
    %v161 = vpack.c.b16 %v147, %v146
    %v162 = vpack.c.b16 %v149, %v148
    %v163 = vpack.c.b16 %v151, %v150
    %v164 = vpack.c.b16 %v153, %v152
    %v165 = vpack.c.b16 %v155, %v154
    %v166 = vpack.c.b16 %v157, %v156
    %v167 = vpack.c.b16 %v159, %v158
    %176 = vmatprep.subr.bf16.mxu0 0
    %177 = vmatpush1.bf16.msra.mxu0 %v167
    %178 = vmatprep.subr.bf16.mxu0 0
    %179 = vmatpush1.bf16.msra.mxu0 %v166
    %180 = vmatprep.subr.bf16.mxu0 0
    %181 = vmatpush1.bf16.msra.mxu0 %v165
    %182 = vmatprep.subr.bf16.mxu0 0
    %183 = vmatpush1.bf16.msra.mxu0 %v164
    %184 = vmatprep.subr.bf16.mxu0 0
    %185 = vmatpush1.bf16.msra.mxu0 %v163
    %186 = vmatprep.subr.bf16.mxu0 0
    %187 = vmatpush1.bf16.msra.mxu0 %v162
    %188 = vmatprep.subr.bf16.mxu0 0
    %189 = vmatpush1.bf16.msra.mxu0 %v161
    %190 = vmatprep.subr.bf16.mxu0 0
    %191 = vmatpush1.bf16.msra.mxu0 %v160
    %192 = vmatprep.subr.bf16.mxu0 0
    %193 = vmatpush2.bf16.msra.mxu0 0
    %194 = vmatprep.subr.bf16.mxu0 0
    %195 = vmatpush2.bf16.msra.mxu0 0
    %196 = vmatprep.subr.bf16.mxu0 0
    %197 = vmatpush2.bf16.msra.mxu0 0
    %198 = vmatprep.subr.bf16.mxu0 0
    %199 = vmatpush2.bf16.msra.mxu0 0
    %200 = vmatprep.subr.bf16.mxu0 0
    %201 = vmatpush2.bf16.msra.mxu0 0
    %202 = vmatprep.subr.bf16.mxu0 0
    %203 = vmatpush2.bf16.msra.mxu0 0
    %204 = vmatprep.subr.bf16.mxu0 0
    %205 = vmatpush2.bf16.msra.mxu0 0
    %206 = vmatprep.subr.bf16.mxu0 0
    %207 = vmatpush2.bf16.msra.mxu0 0
    %208 = vmatprep.mubr.bf16.mxu0 0
    %209 = vmatmul.mubr.bf16.gmra.mxu0 %v123
    %v210 = vpop.f32.mrf.mxu0
    %v211 = vadd.f32 %v127, %v210
    %v212 = vpop.f32.mrf.mxu0
    %v213 = vpop.f32.mrf.mxu0
    %v214 = vpop.f32.mrf.mxu0
    %215 = vdwg.mxu0
    %vm216 = vcmp.gt.f32.partialorder %v211, 20.0
    %v217 = vmin.f32 %v211, 20.0
    %v218 = vmul.f32 %v217, 1.442695
    %v219 = vpow.pop %v218
    %v220 = vadd.f32 %v219, 1.0
    %v221 = vlog2.pop %v220
    %v222 = vmul.f32 %v221, 0.6931472
    %v223 = vmul.f32 -0.5, %v219
    %v224 = vadd.f32 %v223, 1.0
    %v225 = vmul.f32 %v224, %v219
    %v226 = vand.u32 2147483647, %v219
    %vm227 = vcmp.lt.f32.partialorder %v226, 0.0004427343
    %v228 = vsel %vm227, %v225, %v222
    %v229 = vsel %vm216, %v211, %v228
    %v230 = vpack.c.bf16 %v229, %v229
    %v231 = vlaneseq
    %v232 = vshrl.u32 %v231, 7
    %v233 = vsub.s32 2, %v232
    %v234 = vrot.slane %v56, %v233
    %v251 = vunpack.c.l.b16 %v40
    %v252 = vunpack.c.l.b16 %v41
    %v253 = vunpack.c.l.b16 %v42
    %v254 = vunpack.c.l.b16 %v43
    %v255 = vunpack.c.l.b16 %v44
    %v256 = vunpack.c.l.b16 %v45
    %v257 = vunpack.c.l.b16 %v46
    %v258 = vunpack.c.l.b16 %v47
    %v259 = vunpack.c.l.b16 %v48
    %v260 = vunpack.c.l.b16 %v49
    %v261 = vunpack.c.l.b16 %v50
    %v262 = vunpack.c.l.b16 %v51
    %v263 = vunpack.c.l.b16 %v52
    %v264 = vunpack.c.l.b16 %v53
    %v265 = vunpack.c.l.b16 %v54
    %v266 = vunpack.c.l.b16 %v55
    %v267 = vpack.c.b16 %v252, %v251
    %v268 = vpack.c.b16 %v254, %v253
    %v269 = vpack.c.b16 %v256, %v255
    %v270 = vpack.c.b16 %v258, %v257
    %v271 = vpack.c.b16 %v260, %v259
    %v272 = vpack.c.b16 %v262, %v261
    %v273 = vpack.c.b16 %v264, %v263
    %v274 = vpack.c.b16 %v266, %v265
    %283 = vmatprep.subr.bf16.mxu0 0
    %284 = vmatpush1.bf16.msra.mxu0 %v274
    %285 = vmatprep.subr.bf16.mxu0 0
    %286 = vmatpush1.bf16.msra.mxu0 %v273
    %287 = vmatprep.subr.bf16.mxu0 0
    %288 = vmatpush1.bf16.msra.mxu0 %v272
    %289 = vmatprep.subr.bf16.mxu0 0
    %290 = vmatpush1.bf16.msra.mxu0 %v271
    %291 = vmatprep.subr.bf16.mxu0 0
    %292 = vmatpush1.bf16.msra.mxu0 %v270
    %293 = vmatprep.subr.bf16.mxu0 0
    %294 = vmatpush1.bf16.msra.mxu0 %v269
    %295 = vmatprep.subr.bf16.mxu0 0
    %296 = vmatpush1.bf16.msra.mxu0 %v268
    %297 = vmatprep.subr.bf16.mxu0 0
    %298 = vmatpush1.bf16.msra.mxu0 %v267
    %299 = vmatprep.subr.bf16.mxu0 0
    %300 = vmatpush2.bf16.msra.mxu0 0
    %301 = vmatprep.subr.bf16.mxu0 0
    %302 = vmatpush2.bf16.msra.mxu0 0
    %303 = vmatprep.subr.bf16.mxu0 0
    %304 = vmatpush2.bf16.msra.mxu0 0
    %305 = vmatprep.subr.bf16.mxu0 0
    %306 = vmatpush2.bf16.msra.mxu0 0
    %307 = vmatprep.subr.bf16.mxu0 0
    %308 = vmatpush2.bf16.msra.mxu0 0
    %309 = vmatprep.subr.bf16.mxu0 0
    %310 = vmatpush2.bf16.msra.mxu0 0
    %311 = vmatprep.subr.bf16.mxu0 0
    %312 = vmatpush2.bf16.msra.mxu0 0
    %313 = vmatprep.subr.bf16.mxu0 0
    %314 = vmatpush2.bf16.msra.mxu0 0
    %315 = vmatprep.mubr.bf16.mxu0 0
    %316 = vmatmul.mubr.bf16.gmra.mxu0 %v230
    %v317 = vpop.f32.mrf.mxu0
    %v318 = vadd.f32 %v234, %v317
    %v319 = vpop.f32.mrf.mxu0
    %v320 = vpop.f32.mrf.mxu0
    %v321 = vpop.f32.mrf.mxu0
    %322 = vdwg.mxu0
    %323 = vst [vmem:[#allocation2] sm:$0x3] %v318
    // Predicated region
    $region22: #{conditional_guided_conv_model.1} parent=1 // pred_check
      _
    $region23: #{conditional_guided_conv_model.1} parent=1 // pred_check_branch
      %325 = sbr.rel (0) target = $region25
    $region24: #{conditional_guided_conv_model.1} parent=1 // pred_region
      %s327 = ssub.s32 32, 32
      %328 = vsyncadd [#allocation3], %s327
      %s330 = sshll.u32 [#allocation2], 4
      %s331 = int_to_ptr.vmem [resolvable:$true] %s330
      %333 = dma.vmem_to_hbm [thread:$0]  %s331, 32, %s5, [#allocation3]
    $region25: #{conditional_guided_conv_model.1} parent=1 // pred_fallthru
      _
    // Predicated region
    $region26: #{conditional_guided_conv_model.1} parent=1 // pred_check
      _
    $region27: #{conditional_guided_conv_model.1} parent=1 // pred_check_branch
      %335 = sbr.rel (0) target = $region29
    $region28: #{conditional_guided_conv_model.1} parent=1 // pred_region
      %336 = dma.done [#allocation3], 32
    $region29: #{conditional_guided_conv_model.1} parent=1 // pred_fallthru
      _
    %337 = vsyncpa [#allocation3], 1

</llo_original>
